<compile_context>
chip_gen: v7x
topology: tpu7x:2x2x1
jax: 0.10.0
libtpu: 0.0.40
codegen_flags: <defaults>
</compile_context>

<pallas_src>
import functools
from dataclasses import dataclass

import jax
import jax.numpy as jnp
from jax.experimental import pallas as pl
from jax.experimental.pallas import tpu as pltpu


@dataclass(frozen=True)
class StrategyConfig:
    neutral_zone: float = 0.1
    max_pos: float = 1.0
    max_drawdown_threshold: float = 0.2
    risk_scaling_factor: float = 0.5


def _round_up(x, m):
    return ((x + m - 1) // m) * m


def _strategy_kernel(params_ref, slab_ref, out_ref, *, neutral_zone, max_pos):
    # --- scalar parameters from SMEM (scalar slot has plenty of slack) ---
    w0 = params_ref[0]
    w1 = params_ref[1]
    w2 = params_ref[2]
    b = params_ref[3]
    scale = params_ref[4]          # batch-uniform drawdown risk scale

    # Fused input slab: row 0 = p_t, rows 1..3 = regime logits.  Each row is a
    # dense (r_t, C) tile (sublane x lane dense -> full vregs, unmasked vst).
    p = slab_ref[0]                                # (r_t, C)
    l0 = slab_ref[1]
    l1 = slab_ref[2]
    l2 = slab_ref[3]

    # --- 3-class softmax, unrolled across the class axis (pure VPU/EUP,
    #     no cross-lane reduces) ---
    m = jnp.maximum(jnp.maximum(l0, l1), l2)
    e0 = jnp.exp(l0 - m)
    e1 = jnp.exp(l1 - m)
    e2 = jnp.exp(l2 - m)
    inv_denom = pl.reciprocal(e0 + e1 + e2, approx=True)   # EUP slot

    # --- nz_lin: Linear(3,1) on the probabilities, folded with the softmax
    #     normalization.  Far too small for the MXU; stays on the VPU. ---
    lin = (e0 * w0 + e1 * w1 + e2 * w2) * inv_denom + b

    # sigmoid(x) * 2*neutral_zone == (tanh(x/2) + 1) * neutral_zone
    # (one EUP push instead of exp + reciprocal)
    nz = (jnp.tanh(0.5 * lin) + 1.0) * neutral_zone

    # --- neutral-zone thresholding ('/ 0.5' folded into '* 2.0') ---
    hi = 0.5 + 0.5 * nz
    lo = 0.5 - 0.5 * nz
    pos_above = (p - hi) * (2.0 * max_pos)
    pos_below = (p - lo) * (-2.0 * max_pos)
    position = jnp.where(p > hi, pos_above,
                         jnp.where(p < lo, pos_below, 0.0))

    # --- drawdown-based risk scaling (scale == 1.0 when not triggered) ---
    out_ref[...] = jnp.clip(position * scale, -max_pos, max_pos)


@functools.partial(
    jax.jit,
    static_argnames=("config", "has_equity", "use_kernel",
                     "max_lane_width", "max_row_block"))
def _forward_core(p_t, regime_logits, equity_curve, w, b, config,
                  has_equity, use_kernel, max_lane_width, max_row_block):
    B = p_t.shape[0]
    p_f = p_t.astype(jnp.float32).reshape(B, 1)
    logits_f = regime_logits.astype(jnp.float32)
    w_f = jnp.reshape(w.astype(jnp.float32), (3,))
    b_f = jnp.reshape(b.astype(jnp.float32), ())

    # Batch-uniform drawdown scale (the shape check is static; the comparison
    # is data-dependent and folded into a single scalar for SMEM).
    if has_equity:
        eq = equity_curve.astype(jnp.float32)
        drawdown = eq[-1] / jnp.max(eq) - 1.0
        scale = jnp.where(drawdown < -config.max_drawdown_threshold,
                          jnp.float32(config.risk_scaling_factor),
                          jnp.float32(1.0))
    else:
        scale = jnp.float32(1.0)

    if not use_kernel:
        # Small-batch fast path: fused XLA beats pallas dispatch overhead.
        probs = jax.nn.softmax(logits_f, axis=1)
        nz = jax.nn.sigmoid(probs @ w_f + b_f)[:, None] * (2.0 * config.neutral_zone)
        hi = 0.5 + 0.5 * nz
        lo = 0.5 - 0.5 * nz
        pos = jnp.where(p_f > hi, (p_f - hi) * (2.0 * config.max_pos),
                        jnp.where(p_f < lo, (p_f - lo) * (-2.0 * config.max_pos),
                                  0.0))
        return jnp.clip(pos * scale, -config.max_pos, config.max_pos)

    # ---------------- Pallas path ----------------
    LANE, SUB = 128, 8
    # Sublane+lane dense 2-D batch layout: B -> (R, C), C mult of 128,
    # R mult of r_t (mult of 8).  Default tile = 256 x 512 = 128K elems/step.
    C = min(max_lane_width, _round_up(B, LANE))
    rows = -(-B // C)
    r_t = min(max_row_block, _round_up(rows, SUB))
    R = _round_up(rows, r_t)
    Bp = R * C

    # Single fused input slab (4, R, C): row 0 = p, rows 1..3 = logits.
    x = jnp.concatenate([p_f, logits_f], axis=1)           # (B, 4)
    if Bp != B:
        x = jnp.pad(x, ((0, Bp - B), (0, 0)))
    slab = jnp.transpose(x).reshape(4, R, C)                # (4, R, C)

    params = jnp.concatenate([w_f, jnp.reshape(b_f, (1,)),
                              jnp.reshape(scale, (1,))])    # (5,) -> SMEM

    kernel = functools.partial(
        _strategy_kernel,
        neutral_zone=float(config.neutral_zone),
        max_pos=float(config.max_pos),
    )

    out = pl.pallas_call(
        kernel,
        grid_spec=pltpu.PrefetchScalarGridSpec(
            num_scalar_prefetch=1,                  # params -> SMEM scalars
            grid=(R // r_t,),
            in_specs=[
                pl.BlockSpec((4, r_t, C), lambda i, prm: (0, i, 0)),  # slab
            ],
            out_specs=pl.BlockSpec((r_t, C), lambda i, prm: (i, 0)),
        ),
        out_shape=jax.ShapeDtypeStruct((R, C), jnp.float32),
        compiler_params=pltpu.CompilerParams(
            dimension_semantics=("parallel",)),
        cost_estimate=pl.CostEstimate(
            flops=int(25 * Bp),
            transcendentals=int(5 * Bp),
            bytes_accessed=int(20 * Bp)),
    )(params, slab)

    # Padded lanes carry garbage; always slice before returning.
    return out.reshape(Bp)[:B].reshape(B, 1)


def strategy_forward(p_t, regime_logits, equity_curve, w, b, config,
                     *, min_kernel_batch=4096, max_lane_width=512,
                     max_row_block=256):
    """p_t: (B,1), regime_logits: (B,3), equity_curve: (E,) or None,
    w: (1,3) nn.Linear weight, b: (1,) or (1,1) bias.  Returns (B,1) f32."""
    B = p_t.shape[0]
    has_equity = equity_curve is not None and equity_curve.shape[0] > 1
    use_kernel = B >= min_kernel_batch
    eq = equity_curve if has_equity else jnp.ones((1,), jnp.float32)
    return _forward_core(p_t, regime_logits, eq, w, b, config,
                         has_equity=has_equity, use_kernel=use_kernel,
                         max_lane_width=int(max_lane_width),
                         max_row_block=int(max_row_block))


def _reference_forward(p_t, regime_logits, equity_curve, w, b, cfg):
    """Pure-JAX reference mirroring the PyTorch forward."""
    probs = jax.nn.softmax(regime_logits, axis=1)
    nz = jax.nn.sigmoid(probs @ w.T + jnp.reshape(b, (1, 1))) * cfg.neutral_zone * 2.0
    above = p_t > 0.5 + nz / 2
    below = p_t < 0.5 - nz / 2
    pos = jnp.where(above, (p_t - (0.5 + nz / 2)) / 0.5 * cfg.max_pos,
                    jnp.where(below, (p_t - (0.5 - nz / 2)) / 0.5 * -cfg.max_pos,
                              jnp.zeros_like(p_t)))
    if equity_curve is not None and equity_curve.shape[0] > 1:
        dd = equity_curve[-1] / jnp.max(equity_curve) - 1.0
        pos = pos * jnp.where(dd < -cfg.max_drawdown_threshold,
                              cfg.risk_scaling_factor, 1.0)
    return jnp.clip(pos, -cfg.max_pos, cfg.max_pos)


if __name__ == "__main__":
    cfg = StrategyConfig(neutral_zone=0.1, max_pos=1.0,
                         max_drawdown_threshold=0.2, risk_scaling_factor=0.5)

    key = jax.random.PRNGKey(0)
    k_p, k_l, k_e, k_w, k_b = jax.random.split(key, 5)

    B, E = 8, 8
    p_t = jax.random.uniform(k_p, (B, 1), dtype=jnp.float32)
    regime_logits = jax.random.normal(k_l, (B, 3), dtype=jnp.float32)
    equity_curve = 1.0 + 0.1 * jax.random.normal(k_e, (E,), dtype=jnp.float32)

    # Deterministic nn.Linear(3, 1) parameters (same shapes as PyTorch).
    w = jax.random.normal(k_w, (1, 3), dtype=jnp.float32) * 0.5
    b = jax.random.normal(k_b, (1, 1), dtype=jnp.float32) * 0.1

    # Case 1: small B forced through the Pallas kernel (no drawdown trigger).
    out1 = jax.block_until_ready(
        strategy_forward(p_t, regime_logits, equity_curve, w, b, cfg,
                         min_kernel_batch=0))
    ref1 = _reference_forward(p_t, regime_logits, equity_curve, w, b, cfg)
    assert out1.shape == (B, 1)
    assert jnp.allclose(out1, ref1, atol=2e-3, rtol=2e-3), (out1, ref1)

    # Case 2: forced drawdown (> threshold) exercises the risk-scaling path.
    eq_dd = jnp.array([1.0, 1.2, 1.3, 1.25, 1.1, 1.0, 0.95, 0.9],
                      dtype=jnp.float32)
    out2 = jax.block_until_ready(
        strategy_forward(p_t, regime_logits, eq_dd, w, b, cfg,
                         min_kernel_batch=0))
    ref2 = _reference_forward(p_t, regime_logits, eq_dd, w, b, cfg)
    assert jnp.allclose(out2, ref2, atol=2e-3, rtol=2e-3), (out2, ref2)

    # Case 3: no equity curve; small-B pure-XLA fast path (default threshold).
    out3 = jax.block_until_ready(
        strategy_forward(p_t, regime_logits, None, w, b, cfg))
    ref3 = _reference_forward(p_t, regime_logits, None, w, b, cfg)
    assert jnp.allclose(out3, ref3, atol=2e-3, rtol=2e-3), (out3, ref3)

    # Case 4: medium B through the kernel with small tile overrides so the
    # multi-step pipelined grid path (4 steps) is exercised.
    B4 = 4096
    kp2, kl2 = jax.random.split(jax.random.PRNGKey(1), 2)
    p4 = jax.random.uniform(kp2, (B4, 1), dtype=jnp.float32)
    l4 = jax.random.normal(kl2, (B4, 3), dtype=jnp.float32)
    out4 = jax.block_until_ready(
        strategy_forward(p4, l4, equity_curve, w, b, cfg,
                         min_kernel_batch=0,
                         max_lane_width=128, max_row_block=8))
    ref4 = _reference_forward(p4, l4, equity_curve, w, b, cfg)
    assert out4.shape == (B4, 1)
    assert jnp.allclose(out4, ref4, atol=2e-3, rtol=2e-3)

    print("KERNEL_OK")
</pallas_src>

<mosaic_0001>
module attributes {stable_mosaic.version = 11 : i64} {
  func.func @_strategy_kernel(%arg0: i32, %arg1: memref<5xf32, #tpu.memory_space<smem>>, %arg2: memref<4x8x128xf32, #tpu.memory_space<vmem>>, %arg3: memref<8x128xf32, #tpu.memory_space<vmem>>) attributes {dimension_semantics = [#tpu.dimension_semantics<parallel>], iteration_bounds = array<i64: 1>, scalar_prefetch = 1 : i64, scratch_operands = 0 : i64, tpu.core_type = #tpu.core_type<tc>, window_params = [{transform_indices = @transform_0, window_bounds = array<i64: 4, 8, 128>}, {transform_indices = @transform_1, window_bounds = array<i64: 8, 128>}]} {
    %c0 = arith.constant 0 : index
    %0 = memref.load %arg1[%c0] : memref<5xf32, #tpu.memory_space<smem>>
    %c1 = arith.constant 1 : index
    %1 = memref.load %arg1[%c1] : memref<5xf32, #tpu.memory_space<smem>>
    %c2 = arith.constant 2 : index
    %2 = memref.load %arg1[%c2] : memref<5xf32, #tpu.memory_space<smem>>
    %c3 = arith.constant 3 : index
    %3 = memref.load %arg1[%c3] : memref<5xf32, #tpu.memory_space<smem>>
    %c4 = arith.constant 4 : index
    %4 = memref.load %arg1[%c4] : memref<5xf32, #tpu.memory_space<smem>>
    %c0_0 = arith.constant 0 : index
    %c0_1 = arith.constant 0 : index
    %c0_2 = arith.constant 0 : index
    %5 = vector.load %arg2[%c0_0, %c0_1, %c0_2] : memref<4x8x128xf32, #tpu.memory_space<vmem>>, vector<1x8x128xf32>
    %6 = vector.shape_cast %5 : vector<1x8x128xf32> to vector<8x128xf32>
    %c1_3 = arith.constant 1 : index
    %c0_4 = arith.constant 0 : index
    %c0_5 = arith.constant 0 : index
    %7 = vector.load %arg2[%c1_3, %c0_4, %c0_5] : memref<4x8x128xf32, #tpu.memory_space<vmem>>, vector<1x8x128xf32>
    %8 = vector.shape_cast %7 : vector<1x8x128xf32> to vector<8x128xf32>
    %c2_6 = arith.constant 2 : index
    %c0_7 = arith.constant 0 : index
    %c0_8 = arith.constant 0 : index
    %9 = vector.load %arg2[%c2_6, %c0_7, %c0_8] : memref<4x8x128xf32, #tpu.memory_space<vmem>>, vector<1x8x128xf32>
    %10 = vector.shape_cast %9 : vector<1x8x128xf32> to vector<8x128xf32>
    %c3_9 = arith.constant 3 : index
    %c0_10 = arith.constant 0 : index
    %c0_11 = arith.constant 0 : index
    %11 = vector.load %arg2[%c3_9, %c0_10, %c0_11] : memref<4x8x128xf32, #tpu.memory_space<vmem>>, vector<1x8x128xf32>
    %12 = vector.shape_cast %11 : vector<1x8x128xf32> to vector<8x128xf32>
    %13 = arith.maximumf %8, %10 : vector<8x128xf32>
    %14 = arith.maximumf %13, %12 : vector<8x128xf32>
    %15 = arith.subf %8, %14 : vector<8x128xf32>
    %16 = math.exp %15 : vector<8x128xf32>
    %17 = arith.subf %10, %14 : vector<8x128xf32>
    %18 = math.exp %17 : vector<8x128xf32>
    %19 = arith.subf %12, %14 : vector<8x128xf32>
    %20 = math.exp %19 : vector<8x128xf32>
    %21 = arith.addf %16, %18 : vector<8x128xf32>
    %22 = arith.addf %21, %20 : vector<8x128xf32>
    %23 = tpu.reciprocal %22 {approx = true} : vector<8x128xf32> -> vector<8x128xf32>
    %24 = vector.broadcast %0 : f32 to vector<8x128xf32>
    %25 = arith.mulf %16, %24 : vector<8x128xf32>
    %26 = vector.broadcast %1 : f32 to vector<8x128xf32>
    %27 = arith.mulf %18, %26 : vector<8x128xf32>
    %28 = arith.addf %25, %27 : vector<8x128xf32>
    %29 = vector.broadcast %2 : f32 to vector<8x128xf32>
    %30 = arith.mulf %20, %29 : vector<8x128xf32>
    %31 = arith.addf %28, %30 : vector<8x128xf32>
    %32 = arith.mulf %31, %23 : vector<8x128xf32>
    %33 = vector.broadcast %3 : f32 to vector<8x128xf32>
    %34 = arith.addf %32, %33 : vector<8x128xf32>
    %cst = arith.constant 5.000000e-01 : f32
    %35 = vector.broadcast %cst : f32 to vector<8x128xf32>
    %36 = arith.mulf %35, %34 : vector<8x128xf32>
    %37 = math.tanh %36 : vector<8x128xf32>
    %cst_12 = arith.constant 1.000000e+00 : f32
    %38 = vector.broadcast %cst_12 : f32 to vector<8x128xf32>
    %39 = arith.addf %37, %38 : vector<8x128xf32>
    %cst_13 = arith.constant 1.000000e-01 : f32
    %40 = vector.broadcast %cst_13 : f32 to vector<8x128xf32>
    %41 = arith.mulf %39, %40 : vector<8x128xf32>
    %cst_14 = arith.constant 5.000000e-01 : f32
    %42 = vector.broadcast %cst_14 : f32 to vector<8x128xf32>
    %43 = arith.mulf %42, %41 : vector<8x128xf32>
    %cst_15 = arith.constant 5.000000e-01 : f32
    %44 = vector.broadcast %cst_15 : f32 to vector<8x128xf32>
    %45 = arith.addf %44, %43 : vector<8x128xf32>
    %cst_16 = arith.constant 5.000000e-01 : f32
    %46 = vector.broadcast %cst_16 : f32 to vector<8x128xf32>
    %47 = arith.mulf %46, %41 : vector<8x128xf32>
    %cst_17 = arith.constant 5.000000e-01 : f32
    %48 = vector.broadcast %cst_17 : f32 to vector<8x128xf32>
    %49 = arith.subf %48, %47 : vector<8x128xf32>
    %50 = arith.subf %6, %45 : vector<8x128xf32>
    %cst_18 = arith.constant 2.000000e+00 : f32
    %51 = vector.broadcast %cst_18 : f32 to vector<8x128xf32>
    %52 = arith.mulf %50, %51 : vector<8x128xf32>
    %53 = arith.subf %6, %49 : vector<8x128xf32>
    %cst_19 = arith.constant -2.000000e+00 : f32
    %54 = vector.broadcast %cst_19 : f32 to vector<8x128xf32>
    %55 = arith.mulf %53, %54 : vector<8x128xf32>
    %56 = arith.cmpf ogt, %6, %45 : vector<8x128xf32>
    %57 = arith.cmpf olt, %6, %49 : vector<8x128xf32>
    %cst_20 = arith.constant 0.000000e+00 : f32
    %58 = vector.broadcast %cst_20 : f32 to vector<8x128xf32>
    %59 = arith.select %57, %55, %58 : vector<8x128xi1>, vector<8x128xf32>
    %60 = arith.select %56, %52, %59 : vector<8x128xi1>, vector<8x128xf32>
    %61 = vector.broadcast %4 : f32 to vector<8x128xf32>
    %62 = arith.mulf %60, %61 : vector<8x128xf32>
    %cst_21 = arith.constant -1.000000e+00 : f32
    %cst_22 = arith.constant 1.000000e+00 : f32
    %63 = vector.broadcast %cst_21 : f32 to vector<8x128xf32>
    %64 = arith.maximumf %63, %62 : vector<8x128xf32>
    %65 = vector.broadcast %cst_22 : f32 to vector<8x128xf32>
    %66 = arith.minimumf %65, %64 : vector<8x128xf32>
    %c0_23 = arith.constant 0 : index
    %c0_24 = arith.constant 0 : index
    %67 = vector.load %arg3[%c0_23, %c0_24] : memref<8x128xf32, #tpu.memory_space<vmem>>, vector<8x128xf32>
    tpu.vector_store %arg3[%c0_23, %c0_24], %66 {strides = array<i32>} : memref<8x128xf32, #tpu.memory_space<vmem>>, vector<8x128xf32>,
    return
  }
  func.func @transform_0(%arg0: i32, %arg1: memref<5xf32, #tpu.memory_space<smem>>) -> (i32, i32, i32) {
    %c0_i32 = arith.constant 0 : i32
    %c0_i32_0 = arith.constant 0 : i32
    %c0_i32_1 = arith.constant 0 : i32
    return %c0_i32, %arg0, %c0_i32_0 : i32, i32, i32
  }
  func.func @transform_1(%arg0: i32, %arg1: memref<5xf32, #tpu.memory_space<smem>>) -> (i32, i32) {
    %c0_i32 = arith.constant 0 : i32
    %c0_i32_0 = arith.constant 0 : i32
    return %arg0, %c0_i32 : i32, i32
  }
}

</mosaic_0001>

<llo_original>
// kernel: _forward_core.1
$region0: #{_forward_core.1}
  #allocation0 [shape = 'u32[]', space=smem, size = 0x4, offset = 0x4, fixed_abs, tag = 'smem constant byte address 0x4 - core index']
  #allocation1 [shape = 'u32[144,128]{1,0:T(1,128)}', space=vmem, size = 0x12000, scoped, tag = 'internal scratch']
  #allocation2 [shape = 's32[1]{0}', space=sflag, size = 0x4, scoped, tag = 'scoped memory for _forward_core.1']
  #allocation3 [shape = 'u8[512]{0}', space=smem, size = 0x200, scoped, tag = 'prefetched SMEM operand 0']
  %s0 = inlined_call_operand.vmem [shape: f32[5], index: 0, kind: input, shape index: {}]
  %s1 = inlined_call_operand.vmem [shape: f32[4,8,128], index: 1, kind: input, shape index: {}]
  %s2 = inlined_call_operand.vmem [shape: f32[8,128], index: 2, kind: output, shape index: {}]
  %s3 = sld [smem:[#allocation0]]
  $region14: #{_forward_core.1} parent=0
    _
  %s5 = ssub.s32 1, %s3
  %s6 = scalar_select 0, %s5, %s3
  %s7 = sshll.u32 %s0, 4
  %s8 = int_to_ptr.vmem [resolvable:$true] %s7
  %10 = dma.vmem_to_smem %s8, 16, [#allocation3], [#allocation2]
  %11 = dma.done [#allocation2], 16
  %12 = sfence
  // Predicated region
  $region2: #{_forward_core.1} parent=0 // pred_check
    _
  $region3: #{_forward_core.1} parent=0 // pred_check_branch
    %14 = sbr.rel (0) target = $region5
  $region4: #{_forward_core.1} parent=0 // pred_region
    _
  $region5: #{_forward_core.1} parent=0 // pred_fallthru
    _
  %s15 = sld [smem:[#allocation3]]
  %s16 = sld [smem:[#allocation3 + $0x1]]
  %s17 = sld [smem:[#allocation3 + $0x2]]
  %s18 = sld [smem:[#allocation3 + $0x3]]
  %s19 = sld [smem:[#allocation3 + $0x4]]
  %v20 = vld [vmem:[%s1] sm:$0xff]
  %s21 = scalar_lea.vmem %s1, 8
  %v22 = vld [vmem:[%s21] sm:$0xff]
  %s23 = scalar_lea.vmem %s1, 16
  %v24 = vld [vmem:[%s23] sm:$0xff]
  %s25 = scalar_lea.vmem %s1, 24
  %v26 = vld [vmem:[%s25] sm:$0xff]
  %v27 = vmax.f32 %v22, %v24
  %v28 = vmax.f32 %v27, %v26
  %v29 = vsub.f32 %v22, %v28
  %v30 = vmul.f32 %v29, 1.442695
  %v31 = vpow.pop %v30
  %v32 = vsub.f32 %v24, %v28
  %v33 = vmul.f32 %v32, 1.442695
  %v34 = vpow.pop %v33
  %v35 = vsub.f32 %v26, %v28
  %v36 = vmul.f32 %v35, 1.442695
  %v37 = vpow.pop %v36
  %v38 = vadd.f32 %v31, %v34
  %v39 = vadd.f32 %v38, %v37
  %v40 = vrcp.pop %v39
  %v41 = vstv %s15
  %v42 = vmul.f32 %v31, %v41
  %v43 = vstv %s16
  %v44 = vmul.f32 %v34, %v43
  %v45 = vadd.f32 %v42, %v44
  %v46 = vstv %s17
  %v47 = vmul.f32 %v37, %v46
  %v48 = vadd.f32 %v45, %v47
  %v49 = vmul.f32 %v48, %v40
  %v50 = vstv %s18
  %v51 = vadd.f32 %v49, %v50
  %v52 = vmul.f32 %v51, 0.5
  %v53 = vtanh.pop %v52
  %v54 = vadd.f32 %v53, 1.0
  %v55 = vmul.f32 %v54, 0.1
  %v56 = vmul.f32 %v55, 0.5
  %v57 = vadd.f32 %v56, 0.5
  %v58 = vsub.f32 0.5, %v56
  %v59 = vsub.f32 %v20, %v57
  %v60 = vmul.f32 %v59, 2.0
  %v61 = vsub.f32 %v20, %v58
  %v62 = vmul.f32 %v61, -2.0
  %vm63 = vcmp.gt.f32.partialorder %v20, %v57
  %vm64 = vcmp.lt.f32.partialorder %v20, %v58
  %v65 = vsel %vm64, %v62, 0.0
  %v66 = vsel %vm63, %v60, %v65
  %v67 = vstv %s19
  %v68 = vmul.f32 %v66, %v67
  %v69 = vmax.f32 %v68, -1.0
  %v70 = vmin.f32 %v69, 1.0
  %71 = vst [vmem:[%s2] sm:$0xff] %v70
  // Predicated region
  $region6: #{_forward_core.1} parent=0 // pred_check
    _
  $region7: #{_forward_core.1} parent=0 // pred_check_branch
    %73 = sbr.rel (0) target = $region9
  $region8: #{_forward_core.1} parent=0 // pred_region
    _
  $region9: #{_forward_core.1} parent=0 // pred_fallthru
    _
  // Predicated region
  $region10: #{_forward_core.1} parent=0 // pred_check
    _
  $region11: #{_forward_core.1} parent=0 // pred_check_branch
    %75 = sbr.rel (0) target = $region13
  $region12: #{_forward_core.1} parent=0 // pred_region
    _
  $region13: #{_forward_core.1} parent=0 // pred_fallthru
    _

</llo_original>
